<compile_context>
chip_gen: v5e
topology: v5e:2x2
jax: 0.10.0
libtpu: 0.0.40
codegen_flags: <defaults>
</compile_context>

<pallas_src>
import jax
import jax.numpy as jnp
from jax.experimental import pallas as pl
from jax.experimental.pallas import tpu as pltpu


# ---------------------------------------------------------------------------
# Kernel
# ---------------------------------------------------------------------------
def _make_kernel(batch_block, seg):
    def kernel(x_ref, w1_ref, w2_ref, b1_ref, b2_ref, o_ref):
        # x block: (B, C1, H, seg), natural NCHW layout, input dtype.
        # B is small (<= 8): a static Python loop keeps every op a simple
        # (sublane, lane) tile op that Mosaic sees fully unrolled.
        for b in range(batch_block):
            xb = x_ref[b]                                        # (C1, H, seg)

            # AdaptiveMaxPool2d((1, seg)) with uniform bins == max over H
            # (any per-bin fold over W//seg was done losslessly in the wrapper).
            # Reduce in the input dtype; cast only the small pooled tile.
            pooled = jnp.max(xb, axis=1).astype(jnp.float32)     # (C1, seg)

            # Conv2d (1,3), padding (0,1): neighbour taps via lane rotation.
            # pltpu.roll needs non-negative shifts: +1 == left neighbour,
            # seg-1 (== -1 mod seg) == right neighbour.  The wrap-around columns
            # are exactly the zero-padding columns and are masked to 0.
            lane = jax.lax.broadcasted_iota(jnp.int32, pooled.shape, 1)
            left = jnp.where(lane == 0, 0.0,
                             pltpu.roll(pooled, shift=1, axis=1))
            right = jnp.where(lane == seg - 1, 0.0,
                              pltpu.roll(pooled, shift=seg - 1, axis=1))

            # Single fused MXU pass over the three taps: w1_ref is (C1, 3*C1) with
            # column blocks [tap k=0 | k=1 | k=2]; BN1 scale is folded into it.
            taps = jnp.concatenate([left, pooled, right], axis=0)   # (3*C1, seg)
            y = jnp.dot(w1_ref[...], taps, preferred_element_type=jnp.float32)
            y = jnp.maximum(y + b1_ref[...], 0.0)                   # BN1 shift + ReLU

            # TODO(synk): Dropout2d(0.2) is identity in eval mode; train-mode
            # channel dropout is not implemented here.

            # Conv2d 1x1 (BN2 scale folded) + shift + ReLU.
            z = jnp.dot(w2_ref[...], y, preferred_element_type=jnp.float32)
            z = jnp.maximum(z + b2_ref[...], 0.0)

            # (C2, seg) store; seg < 128 => masked vst, but this tile is tiny
            # compared with the (C1, H, seg) input stream that bounds the step.
            o_ref[b] = z.astype(o_ref.dtype)

    return kernel


# ---------------------------------------------------------------------------
# Wrapper helpers: padded-tile VMEM accounting and batch-block selection
# ---------------------------------------------------------------------------
def _round_up(x, m):
    return (x + m - 1) // m * m


def _padded_tile_bytes(sublane, lane, dtype):
    """VMEM bytes of a (sublane, lane) tile after (8,128)-style layout padding."""
    itemsize = jnp.dtype(dtype).itemsize
    sub = max(8, 32 // itemsize)          # f32 -> 8, bf16 -> 16, int8/fp8 -> 32
    return _round_up(sublane, sub) * _round_up(lane, 128) * itemsize


def _vmem_capacity_bytes():
    try:
        return int(pltpu.get_tpu_info().vmem_capacity_bytes)
    except Exception:
        return 64 * 1024 * 1024           # assume the smallest (v7x-class) VMEM


def _pick_batch_block(n, cap):
    """Largest divisor of n that fits `cap`, preferring an even grid of >= 2 steps.

    A divisor of n means no padded tail batches (zero wasted DMA/compute); the
    grid-size preference keeps both v7x TensorCores busy under "parallel".
    """
    cap = max(1, min(n, cap))
    divisors = [d for d in range(1, cap + 1) if n % d == 0]
    for good_grid in (lambda g: g >= 2 and g % 2 == 0,   # even split across 2 TCs
                      lambda g: g >= 2,                  # at least use both TCs
                      lambda g: True):
        cands = [d for d in divisors if good_grid(n // d)]
        if cands:
            return max(cands)
    return 1


# ---------------------------------------------------------------------------
# Forward wrapper
# ---------------------------------------------------------------------------
def local_forward(x, w1, w2, scale1, shift1, scale2, shift2, *, seg):
    """x: (N, dim1, H, W) NCHW.  w1: (dim1, dim1, 3) (PyTorch (Cout,Cin,1,3) squeezed).
    w2: (dim2, dim1).  scale*/shift* are the folded inference-mode BatchNorm params."""
    N, C1, H, W = x.shape
    C2 = w2.shape[0]
    # TODO(synk): ragged adaptive-pool bins (W % seg != 0) not implemented; SGN
    # always calls `local` with W == seg, so bins are uniform.
    assert W % seg == 0, "W must be a multiple of seg"
    p = W // seg
    if p > 1:
        # Uniform bins fold p adjacent columns each; fold them here (a cheap
        # contiguous minor-axis reduce on a tensor that is never produced by SGN,
        # which always has W == seg, i.e. p == 1 and this branch never runs).
        x = jnp.max(x.reshape(N, C1, H, seg, p), axis=4)

    # ---- Fold BN scales into the conv weights; stack the 1x3 taps so the kernel
    # does a single K=3*C1 MXU pass.  Column block k multiplies input at offset k-1.
    w1f = w1.astype(jnp.float32) * scale1.astype(jnp.float32)[:, None, None]
    w1_stack = jnp.concatenate([w1f[:, :, 0], w1f[:, :, 1], w1f[:, :, 2]], axis=1)
    w2f = w2.astype(jnp.float32) * scale2.astype(jnp.float32)[:, None]
    b1 = shift1.reshape(C1, 1).astype(jnp.float32)
    b2 = shift2.reshape(C2, 1).astype(jnp.float32)

    # ---- VMEM budgeting in padded (8,128)-tile bytes (the (H, seg) tile's padded
    # layout is what actually occupies VMEM, not H*seg logical elements).
    vmem_cap = _vmem_capacity_bytes()            # 64 MiB v7x, 128 MiB v5e/v6e
    budget = int(0.55 * vmem_cap)                # headroom for double-buffering etc.
    in_bytes_per_elem = C1 * _padded_tile_bytes(H, seg, x.dtype)
    out_bytes_per_elem = _padded_tile_bytes(C2, seg, x.dtype)
    fixed_bytes = (_padded_tile_bytes(C1, 3 * C1, jnp.float32)
                   + _padded_tile_bytes(C2, C1, jnp.float32)
                   + _padded_tile_bytes(C1, 1, jnp.float32)
                   + _padded_tile_bytes(C2, 1, jnp.float32))
    per_b = 2 * (in_bytes_per_elem + out_bytes_per_elem)    # double-buffered in/out
    b_cap = max(1, (budget - fixed_bytes) // per_b)
    B = _pick_batch_block(N, min(int(b_cap), 8))  # <=8 keeps the in-kernel unroll small
    G = N // B                                    # B divides N: no padded tail work

    kernel = _make_kernel(B, seg)

    def _full_spec(shape):
        zeros = (0,) * len(shape)
        return pl.BlockSpec(shape, lambda g, _z=zeros: _z)

    # v7x (64 MiB): limit 48 MiB; v5e/v6e (128 MiB): limit 96 MiB.
    vmem_limit = min(int(0.75 * vmem_cap), 100 * 1024 * 1024)

    out = pl.pallas_call(
        kernel,
        out_shape=jax.ShapeDtypeStruct((N, C2, seg), x.dtype),
        grid_spec=pltpu.PrefetchScalarGridSpec(
            num_scalar_prefetch=0,
            grid=(G,),
            in_specs=[
                # Natural-layout batch block: contiguous HBM slab, read exactly once.
                pl.BlockSpec((B, C1, H, seg), lambda g: (g, 0, 0, 0)),
                _full_spec(w1_stack.shape), _full_spec(w2f.shape),
                _full_spec(b1.shape), _full_spec(b2.shape),
            ],
            out_specs=pl.BlockSpec((B, C2, seg), lambda g: (g, 0, 0)),
        ),
        compiler_params=pltpu.CompilerParams(
            dimension_semantics=("parallel",),
            vmem_limit_bytes=vmem_limit),
    )(x, w1_stack, w2f, b1, b2)

    return out[:, :, None, :]                     # (N, C2, 1, seg)


# ---------------------------------------------------------------------------
# Pure-JAX reference mirroring the PyTorch eval-mode forward
# ---------------------------------------------------------------------------
def reference(x, w1, w2, g1, be1, m1, v1, g2, be2, m2, v2, *, seg, eps=1e-5):
    N, C1, H, W = x.shape
    xh = jnp.max(x, axis=2)                                          # (N,C1,W)
    cols = []
    for j in range(seg):
        s = (j * W) // seg
        e = -(-((j + 1) * W) // seg)
        cols.append(jnp.max(xh[:, :, s:e], axis=2, keepdims=True))
    pooled = jnp.concatenate(cols, axis=2)                           # (N,C1,seg)
    pad = jnp.pad(pooled, ((0, 0), (0, 0), (1, 1)))
    y = sum(jnp.einsum('oc,ncs->nos', w1[:, :, k], pad[:, :, k:k + seg])
            for k in range(3))
    y = (y - m1[None, :, None]) / jnp.sqrt(v1[None, :, None] + eps) \
        * g1[None, :, None] + be1[None, :, None]
    y = jnp.maximum(y, 0.0)
    z = jnp.einsum('oc,ncs->nos', w2, y)
    z = (z - m2[None, :, None]) / jnp.sqrt(v2[None, :, None] + eps) \
        * g2[None, :, None] + be2[None, :, None]
    z = jnp.maximum(z, 0.0)
    return z[:, :, None, :]


# ---------------------------------------------------------------------------
# Demo / self-check
# ---------------------------------------------------------------------------
def _run_case(key, *, N, dim1, dim2, H, W, seg, eps=1e-5):
    ks = jax.random.split(key, 11)
    x = jax.random.normal(ks[0], (N, dim1, H, W), jnp.float32)

    # Deterministic synthetic parameters (PyTorch conv weight (Cout,Cin,1,3) squeezed).
    w1 = 0.3 * jax.random.normal(ks[1], (dim1, dim1, 3), jnp.float32)
    w2 = 0.3 * jax.random.normal(ks[2], (dim2, dim1), jnp.float32)
    g1 = 1.0 + 0.1 * jax.random.normal(ks[3], (dim1,), jnp.float32)
    be1 = 0.1 * jax.random.normal(ks[4], (dim1,), jnp.float32)
    m1 = 0.1 * jax.random.normal(ks[5], (dim1,), jnp.float32)
    v1 = jax.random.uniform(ks[6], (dim1,), jnp.float32, 0.5, 1.5)
    g2 = 1.0 + 0.1 * jax.random.normal(ks[7], (dim2,), jnp.float32)
    be2 = 0.1 * jax.random.normal(ks[8], (dim2,), jnp.float32)
    m2 = 0.1 * jax.random.normal(ks[9], (dim2,), jnp.float32)
    v2 = jax.random.uniform(ks[10], (dim2,), jnp.float32, 0.5, 1.5)

    # Fold BatchNorm (inference) into per-channel scale/shift.
    scale1 = g1 / jnp.sqrt(v1 + eps)
    shift1 = be1 - m1 * scale1
    scale2 = g2 / jnp.sqrt(v2 + eps)
    shift2 = be2 - m2 * scale2

    out = jax.block_until_ready(
        local_forward(x, w1, w2, scale1, shift1, scale2, shift2, seg=seg))
    ref = reference(x, w1, w2, g1, be1, m1, v1, g2, be2, m2, v2, seg=seg, eps=eps)
    assert out.shape == (N, dim2, 1, seg), out.shape
    err = float(jnp.max(jnp.abs(out - ref)))
    assert err < 1e-4, err


if __name__ == "__main__":
    key = jax.random.PRNGKey(0)
    k1, k2 = jax.random.split(key)
    # Primary SGN case: W == seg (what SGN's forward always feeds into `local`).
    _run_case(k1, N=2, dim1=8, dim2=16, H=16, W=8, seg=8)
    # General uniform-bin case (W a multiple of seg), batch block of 2 per step.
    _run_case(k2, N=4, dim1=4, dim2=6, H=12, W=16, seg=8)
    print("KERNEL_OK")
</pallas_src>

<mosaic_0001>
module attributes {stable_mosaic.version = 11 : i64} {
  func.func @kernel(%arg0: i32, %arg1: memref<1x8x16x8xf32, #tpu.memory_space<vmem>>, %arg2: memref<8x24xf32, #tpu.memory_space<vmem>>, %arg3: memref<16x8xf32, #tpu.memory_space<vmem>>, %arg4: memref<8x1xf32, #tpu.memory_space<vmem>>, %arg5: memref<16x1xf32, #tpu.memory_space<vmem>>, %arg6: memref<1x16x8xf32, #tpu.memory_space<vmem>>) attributes {dimension_semantics = [#tpu.dimension_semantics<parallel>], iteration_bounds = array<i64: 2>, scalar_prefetch = 0 : i64, scratch_operands = 0 : i64, tpu.core_type = #tpu.core_type<tc>, window_params = [{transform_indices = @transform_0, window_bounds = array<i64: 1, 8, 16, 8>}, {pipeline_mode = #tpu.pipeline_mode<synchronous>, transform_indices = @transform_1, window_bounds = array<i64: 8, 24>}, {pipeline_mode = #tpu.pipeline_mode<synchronous>, transform_indices = @transform_2, window_bounds = array<i64: 16, 8>}, {pipeline_mode = #tpu.pipeline_mode<synchronous>, transform_indices = @transform_3, window_bounds = array<i64: 8, 1>}, {pipeline_mode = #tpu.pipeline_mode<synchronous>, transform_indices = @transform_4, window_bounds = array<i64: 16, 1>}, {transform_indices = @transform_5, window_bounds = array<i64: 1, 16, 8>}]} {
    %c0 = arith.constant 0 : index
    %c0_0 = arith.constant 0 : index
    %c0_1 = arith.constant 0 : index
    %c0_2 = arith.constant 0 : index
    %0 = vector.load %arg1[%c0, %c0_0, %c0_1, %c0_2] : memref<1x8x16x8xf32, #tpu.memory_space<vmem>>, vector<1x8x16x8xf32>
    %1 = vector.shape_cast %0 : vector<1x8x16x8xf32> to vector<8x16x8xf32>
    %cst = arith.constant dense<0xFF800000> : vector<8x8xf32>
    %2 = vector.multi_reduction <maximumf>, %1, %cst [1] : vector<8x16x8xf32> to vector<8x8xf32>
    %3 = tpu.iota {dimensions = array<i32: 1>} : vector<8x8xi32>
    %c0_i32 = arith.constant 0 : i32
    %4 = vector.broadcast %c0_i32 : i32 to vector<8x8xi32>
    %5 = arith.cmpi eq, %3, %4 : vector<8x8xi32>
    %c1_i32 = arith.constant 1 : i32
    %6 = tpu.dynamic_rotate %2 by %c1_i32 dim 1 : vector<8x8xf32>, i32 -> vector<8x8xf32>
    %cst_3 = arith.constant 0.000000e+00 : f32
    %7 = vector.broadcast %cst_3 : f32 to vector<8x8xf32>
    %8 = arith.select %5, %7, %6 : vector<8x8xi1>, vector<8x8xf32>
    %c7_i32 = arith.constant 7 : i32
    %9 = vector.broadcast %c7_i32 : i32 to vector<8x8xi32>
    %10 = arith.cmpi eq, %3, %9 : vector<8x8xi32>
    %c7_i32_4 = arith.constant 7 : i32
    %11 = tpu.dynamic_rotate %2 by %c7_i32_4 dim 1 : vector<8x8xf32>, i32 -> vector<8x8xf32>
    %cst_5 = arith.constant 0.000000e+00 : f32
    %12 = vector.broadcast %cst_5 : f32 to vector<8x8xf32>
    %13 = arith.select %10, %12, %11 : vector<8x8xi1>, vector<8x8xf32>
    %14 = tpu.concatenate %8, %2, %13 in 0 : vector<8x8xf32>, vector<8x8xf32>, vector<8x8xf32> -> vector<24x8xf32>
    %c0_6 = arith.constant 0 : index
    %c0_7 = arith.constant 0 : index
    %15 = vector.load %arg2[%c0_6, %c0_7] : memref<8x24xf32, #tpu.memory_space<vmem>>, vector<8x24xf32>
    %cst_8 = arith.constant dense<0.000000e+00> : vector<8x8xf32>
    %16 = tpu.matmul %15, %14, %cst_8 {dimension_numbers = #tpu.dot_dimension_numbers<[1], [0], [0], [1], [0, 0, 1, 1], [], []>} : vector<8x24xf32>, vector<24x8xf32>, vector<8x8xf32> -> vector<8x8xf32>
    %c0_9 = arith.constant 0 : index
    %c0_10 = arith.constant 0 : index
    %17 = vector.load %arg4[%c0_9, %c0_10] : memref<8x1xf32, #tpu.memory_space<vmem>>, vector<8x1xf32>
    %18 = vector.broadcast %17 : vector<8x1xf32> to vector<8x8xf32>
    %19 = arith.addf %16, %18 : vector<8x8xf32>
    %cst_11 = arith.constant 0.000000e+00 : f32
    %20 = vector.broadcast %cst_11 : f32 to vector<8x8xf32>
    %21 = arith.maximumf %19, %20 : vector<8x8xf32>
    %c0_12 = arith.constant 0 : index
    %c0_13 = arith.constant 0 : index
    %22 = vector.load %arg3[%c0_12, %c0_13] : memref<16x8xf32, #tpu.memory_space<vmem>>, vector<16x8xf32>
    %cst_14 = arith.constant dense<0.000000e+00> : vector<16x8xf32>
    %23 = tpu.matmul %22, %21, %cst_14 {dimension_numbers = #tpu.dot_dimension_numbers<[1], [0], [0], [1], [0, 0, 1, 1], [], []>} : vector<16x8xf32>, vector<8x8xf32>, vector<16x8xf32> -> vector<16x8xf32>
    %c0_15 = arith.constant 0 : index
    %c0_16 = arith.constant 0 : index
    %24 = vector.load %arg5[%c0_15, %c0_16] : memref<16x1xf32, #tpu.memory_space<vmem>>, vector<16x1xf32>
    %25 = vector.broadcast %24 : vector<16x1xf32> to vector<16x8xf32>
    %26 = arith.addf %23, %25 : vector<16x8xf32>
    %cst_17 = arith.constant 0.000000e+00 : f32
    %27 = vector.broadcast %cst_17 : f32 to vector<16x8xf32>
    %28 = arith.maximumf %26, %27 : vector<16x8xf32>
    %c0_18 = arith.constant 0 : index
    %c0_19 = arith.constant 0 : index
    %c0_20 = arith.constant 0 : index
    %29 = vector.load %arg6[%c0_18, %c0_19, %c0_20] : memref<1x16x8xf32, #tpu.memory_space<vmem>>, vector<1x16x8xf32>
    %30 = vector.shape_cast %29 : vector<1x16x8xf32> to vector<16x8xf32>
    %31 = vector.shape_cast %28 : vector<16x8xf32> to vector<1x16x8xf32>
    tpu.vector_store %arg6[%c0_18, %c0_19, %c0_20], %31 {strides = array<i32>} : memref<1x16x8xf32, #tpu.memory_space<vmem>>, vector<1x16x8xf32>,
    return
  }
  func.func @transform_0(%arg0: i32) -> (i32, i32, i32, i32) {
    %c0_i32 = arith.constant 0 : i32
    %c0_i32_0 = arith.constant 0 : i32
    %c0_i32_1 = arith.constant 0 : i32
    %c0_i32_2 = arith.constant 0 : i32
    return %arg0, %c0_i32, %c0_i32_0, %c0_i32_1 : i32, i32, i32, i32
  }
  func.func @transform_1(%arg0: i32) -> (i32, i32) {
    %c0_i32 = arith.constant 0 : i32
    %c0_i32_0 = arith.constant 0 : i32
    %c0_i32_1 = arith.constant 0 : i32
    return %c0_i32, %c0_i32_0 : i32, i32
  }
  func.func @transform_2(%arg0: i32) -> (i32, i32) {
    %c0_i32 = arith.constant 0 : i32
    %c0_i32_0 = arith.constant 0 : i32
    %c0_i32_1 = arith.constant 0 : i32
    return %c0_i32, %c0_i32_0 : i32, i32
  }
  func.func @transform_3(%arg0: i32) -> (i32, i32) {
    %c0_i32 = arith.constant 0 : i32
    %c0_i32_0 = arith.constant 0 : i32
    %c0_i32_1 = arith.constant 0 : i32
    return %c0_i32, %c0_i32_0 : i32, i32
  }
  func.func @transform_4(%arg0: i32) -> (i32, i32) {
    %c0_i32 = arith.constant 0 : i32
    %c0_i32_0 = arith.constant 0 : i32
    %c0_i32_1 = arith.constant 0 : i32
    return %c0_i32, %c0_i32_0 : i32, i32
  }
  func.func @transform_5(%arg0: i32) -> (i32, i32, i32) {
    %c0_i32 = arith.constant 0 : i32
    %c0_i32_0 = arith.constant 0 : i32
    %c0_i32_1 = arith.constant 0 : i32
    return %arg0, %c0_i32, %c0_i32_0 : i32, i32, i32
  }
}

</mosaic_0001>

<llo_original>
// kernel: tpu_custom_call.1
$region0: #{tpu_custom_call.1}
  #allocation0 [shape = 'u32[]', space=smem, size = 0x4, offset = 0x4, fixed_abs, tag = 'smem constant byte address 0x4 - core index']
  #allocation1 [shape = 'u32[72,128]{1,0:T(1,128)}', space=vmem, size = 0x9000, scoped, tag = 'internal scratch']
  %s0 = inlined_call_operand.vmem [shape: f32[2,8,16,8], index: 0, kind: input, shape index: {}]
  %s1 = inlined_call_operand.vmem [shape: f32[8,24], index: 1, kind: input, shape index: {}]
  %s2 = inlined_call_operand.vmem [shape: f32[16,8], index: 2, kind: input, shape index: {}]
  %s3 = inlined_call_operand.vmem [shape: f32[8,1], index: 3, kind: input, shape index: {}]
  %s4 = inlined_call_operand.vmem [shape: f32[16,1], index: 4, kind: input, shape index: {}]
  %s5 = inlined_call_operand.vmem [shape: f32[2,16,8], index: 5, kind: output, shape index: {}]
  %s6 = sld [smem:[#allocation0]]
  $region53: #{tpu_custom_call.1} parent=0
    _
  %s8 = ssub.s32 1, %s6
  %s9 = scalar_select 0, %s8, %s6
  loop: start=0, step=1, limit=4
  $region2: #{tpu_custom_call.1} parent=0 // loop_pre_header
    _
  $region3: #{tpu_custom_call.1} parent=0 // loop_header
    %s11 = sphi 0, %s15
    %p12 = scmp.ge.s32.totalorder %s11, 4
    %s21 = sphi 0, %s23
    %s24 = sphi 0, %s21
    %s25 = sphi 0, %s24
    %s41 = sphi 0, %s25
    %s45 = sphi 0, %s45
    %s47 = sphi 0, %s45
    %s48 = sphi 0, %s47
    %s62 = sphi 0, %s48
    %s66 = sphi 0, %s66
    %s68 = sphi 0, %s66
    %s69 = sphi 0, %s68
    %s83 = sphi 0, %s69
    %s87 = sphi 0, %s87
    %s89 = sphi 0, %s87
    %s90 = sphi 0, %s89
    %s104 = sphi 0, %s90
    %s108 = sphi 0, %s108
    %s110 = sphi 0, %s108
    %s111 = sphi 0, %s110
    %s125 = sphi 0, %s111
    %s131 = sphi 0, %s133
    %s134 = sphi 0, %s131
    %s135 = sphi 0, %s134
    %s151 = sphi 0, %s135
  $region4: #{tpu_custom_call.1} parent=0 // loop_header_branch
    %14 = sbr.rel (%p12) target = $region8
  $region5: #{tpu_custom_call.1} parent=0 // loop_body
    %s16 = ssub.s32 %s11, 1
    %s17 = ssub.s32 %s11, 2
    %s18 = sadd.s32 %s11, 1
    %s19 = ssub.s32 %s11, %s18
    %p20 = scmp.eq.s32.totalorder %s19, 0
    %s22 = sadd.s32 %s21, 1
    %s23 = scalar_select %p20, %s21, %s22
    %p26 = pneg %p20
    %p27 = scmp.eq.s32.totalorder %s11, 1
    %p28 = por %p26, %p27
    %p29 = scmp.ne.s32.totalorder %s21, %s24
    %p30 = scmp.eq.s32.totalorder %s11, 0
    %p31 = por %p29, %p30
    %p32 = scmp.ne.s32.totalorder %s21, %s24
    %p33 = scmp.eq.s32.totalorder %s16, 1
    %p34 = por %p32, %p33
    %p35 = scmp.ne.s32.totalorder %s24, %s25
    %p36 = scmp.eq.s32.totalorder %s16, 0
    %p37 = por %p35, %p36
    %p38 = scmp.ne.s32.totalorder %s24, %s25
    %p39 = scmp.eq.s32.totalorder %s17, 1
    %p40 = por %p38, %p39
    %p42 = scmp.ne.s32.totalorder %s25, %s41
    %p43 = scmp.eq.s32.totalorder %s17, 0
    %p44 = por %p42, %p43
    %s46 = sadd.s32 %s45, 1
    %p49 = scmp.eq.s32.totalorder %s11, 1
    %p50 = scmp.ne.s32.totalorder %s45, %s47
    %p51 = scmp.eq.s32.totalorder %s11, 0
    %p52 = por %p50, %p51
    %p53 = scmp.ne.s32.totalorder %s45, %s47
    %p54 = scmp.eq.s32.totalorder %s16, 1
    %p55 = por %p53, %p54
    %p56 = scmp.ne.s32.totalorder %s47, %s48
    %p57 = scmp.eq.s32.totalorder %s16, 0
    %p58 = por %p56, %p57
    %p59 = scmp.ne.s32.totalorder %s47, %s48
    %p60 = scmp.eq.s32.totalorder %s17, 1
    %p61 = por %p59, %p60
    %p63 = scmp.ne.s32.totalorder %s48, %s62
    %p64 = scmp.eq.s32.totalorder %s17, 0
    %p65 = por %p63, %p64
    %s67 = sadd.s32 %s66, 1
    %p70 = scmp.eq.s32.totalorder %s11, 1
    %p71 = scmp.ne.s32.totalorder %s66, %s68
    %p72 = scmp.eq.s32.totalorder %s11, 0
    %p73 = por %p71, %p72
    %p74 = scmp.ne.s32.totalorder %s66, %s68
    %p75 = scmp.eq.s32.totalorder %s16, 1
    %p76 = por %p74, %p75
    %p77 = scmp.ne.s32.totalorder %s68, %s69
    %p78 = scmp.eq.s32.totalorder %s16, 0
    %p79 = por %p77, %p78
    %p80 = scmp.ne.s32.totalorder %s68, %s69
    %p81 = scmp.eq.s32.totalorder %s17, 1
    %p82 = por %p80, %p81
    %p84 = scmp.ne.s32.totalorder %s69, %s83
    %p85 = scmp.eq.s32.totalorder %s17, 0
    %p86 = por %p84, %p85
    %s88 = sadd.s32 %s87, 1
    %p91 = scmp.eq.s32.totalorder %s11, 1
    %p92 = scmp.ne.s32.totalorder %s87, %s89
    %p93 = scmp.eq.s32.totalorder %s11, 0
    %p94 = por %p92, %p93
    %p95 = scmp.ne.s32.totalorder %s87, %s89
    %p96 = scmp.eq.s32.totalorder %s16, 1
    %p97 = por %p95, %p96
    %p98 = scmp.ne.s32.totalorder %s89, %s90
    %p99 = scmp.eq.s32.totalorder %s16, 0
    %p100 = por %p98, %p99
    %p101 = scmp.ne.s32.totalorder %s89, %s90
    %p102 = scmp.eq.s32.totalorder %s17, 1
    %p103 = por %p101, %p102
    %p105 = scmp.ne.s32.totalorder %s90, %s104
    %p106 = scmp.eq.s32.totalorder %s17, 0
    %p107 = por %p105, %p106
    %s109 = sadd.s32 %s108, 1
    %p112 = scmp.eq.s32.totalorder %s11, 1
    %p113 = scmp.ne.s32.totalorder %s108, %s110
    %p114 = scmp.eq.s32.totalorder %s11, 0
    %p115 = por %p113, %p114
    %p116 = scmp.ne.s32.totalorder %s108, %s110
    %p117 = scmp.eq.s32.totalorder %s16, 1
    %p118 = por %p116, %p117
    %p119 = scmp.ne.s32.totalorder %s110, %s111
    %p120 = scmp.eq.s32.totalorder %s16, 0
    %p121 = por %p119, %p120
    %p122 = scmp.ne.s32.totalorder %s110, %s111
    %p123 = scmp.eq.s32.totalorder %s17, 1
    %p124 = por %p122, %p123
    %p126 = scmp.ne.s32.totalorder %s111, %s125
    %p127 = scmp.eq.s32.totalorder %s17, 0
    %p128 = por %p126, %p127
    %s129 = ssub.s32 %s11, %s18
    %p130 = scmp.eq.s32.totalorder %s129, 0
    %s132 = sadd.s32 %s131, 1
    %s133 = scalar_select %p130, %s131, %s132
    %p136 = pneg %p130
    %p137 = scmp.eq.s32.totalorder %s11, 1
    %p138 = por %p136, %p137
    %p139 = scmp.ne.s32.totalorder %s131, %s134
    %p140 = scmp.eq.s32.totalorder %s11, 0
    %p141 = por %p139, %p140
    %p142 = scmp.ne.s32.totalorder %s131, %s134
    %p143 = scmp.eq.s32.totalorder %s16, 1
    %p144 = por %p142, %p143
    %p145 = scmp.ne.s32.totalorder %s134, %s135
    %p146 = scmp.eq.s32.totalorder %s16, 0
    %p147 = por %p145, %p146
    %p148 = scmp.ne.s32.totalorder %s134, %s135
    %p149 = scmp.eq.s32.totalorder %s17, 1
    %p150 = por %p148, %p149
    %p152 = scmp.ne.s32.totalorder %s135, %s151
    %p153 = scmp.eq.s32.totalorder %s17, 0
    %p154 = por %p152, %p153
    %p155 = scmp.le.s32.totalorder 1, %s11
    %p156 = scmp.lt.s32.totalorder %s11, 3
    %p157 = pnand %p155, %p156
    %p158 = pneg %p157
    // Predicated region
    $region9: #{tpu_custom_call.1} parent=5 // pred_check
      _
    $region10: #{tpu_custom_call.1} parent=5 // pred_check_branch
      %160 = sbr.rel (%p157) target = $region12
    $region11: #{tpu_custom_call.1} parent=5 // pred_region
      %s161 = ssub.s32 %s11, 1
      // Predicated region
      $region13: #{tpu_custom_call.1} parent=11 // pred_check
        %p162 = pneg %p58
      $region14: #{tpu_custom_call.1} parent=11 // pred_check_branch
        %164 = sbr.rel (%p162) target = $region16
      $region15: #{tpu_custom_call.1} parent=11 // pred_region
        _
      $region16: #{tpu_custom_call.1} parent=11 // pred_fallthru
        _
      // Predicated region
      $region17: #{tpu_custom_call.1} parent=11 // pred_check
        %p165 = pneg %p79
      $region18: #{tpu_custom_call.1} parent=11 // pred_check_branch
        %167 = sbr.rel (%p165) target = $region20
      $region19: #{tpu_custom_call.1} parent=11 // pred_region
        _
      $region20: #{tpu_custom_call.1} parent=11 // pred_fallthru
        _
      // Predicated region
      $region21: #{tpu_custom_call.1} parent=11 // pred_check
        %p168 = pneg %p100
      $region22: #{tpu_custom_call.1} parent=11 // pred_check_branch
        %170 = sbr.rel (%p168) target = $region24
      $region23: #{tpu_custom_call.1} parent=11 // pred_region
        _
      $region24: #{tpu_custom_call.1} parent=11 // pred_fallthru
        _
      // Predicated region
      $region25: #{tpu_custom_call.1} parent=11 // pred_check
        %p171 = pneg %p121
      $region26: #{tpu_custom_call.1} parent=11 // pred_check_branch
        %173 = sbr.rel (%p171) target = $region28
      $region27: #{tpu_custom_call.1} parent=11 // pred_region
        _
      $region28: #{tpu_custom_call.1} parent=11 // pred_fallthru
        _
    $region12: #{tpu_custom_call.1} parent=5 // pred_fallthru
      _
    %p174 = scmp.lt.s32.totalorder %s11, 2
    // Predicated region
    $region29: #{tpu_custom_call.1} parent=5 // pred_check
      %p175 = pneg %p174
    $region30: #{tpu_custom_call.1} parent=5 // pred_check_branch
      %177 = sbr.rel (%p175) target = $region32
    $region31: #{tpu_custom_call.1} parent=5 // pred_region
      // Predicated region
      $region33: #{tpu_custom_call.1} parent=31 // pred_check
        %p178 = pneg %p31
      $region34: #{tpu_custom_call.1} parent=31 // pred_check_branch
        %180 = sbr.rel (%p178) target = $region36
      $region35: #{tpu_custom_call.1} parent=31 // pred_region
        %p181 = scmp.lt.s32.totalorder %s11, 1
        %s182 = scalar_select %p181, %s11, 1
        %s183 = smul.addr %s182, 16
        %s184 = smul.addr %s183, 8
        %s185 = scalar_lea.vmem %s0, %s184
      $region36: #{tpu_custom_call.1} parent=31 // pred_fallthru
        _
    $region32: #{tpu_custom_call.1} parent=5 // pred_fallthru
      _
    %p186 = scmp.le.s32.totalorder 1, %s11
    %p187 = scmp.lt.s32.totalorder %s11, 3
    %p188 = pnand %p186, %p187
    %p189 = pneg %p188
    // Predicated region
    $region37: #{tpu_custom_call.1} parent=5 // pred_check
      _
    $region38: #{tpu_custom_call.1} parent=5 // pred_check_branch
      %191 = sbr.rel (%p188) target = $region40
    $region39: #{tpu_custom_call.1} parent=5 // pred_region
      %s192 = ssub.s32 %s11, 1
      %p193 = scmp.lt.s32.totalorder %s16, 1
      %s194 = scalar_select %p193, %s16, 1
      %s195 = smul.addr %s194, 16
      %s196 = smul.addr %s195, 8
      %s197 = scalar_lea.vmem %s0, %s196
      %p198 = pneg %p37
      %p199 = pneg %p34
      %p200 = pneg %p58
      %p201 = pneg %p55
      %p202 = pneg %p79
      %p203 = pneg %p76
      %p204 = pneg %p100
      %p205 = pneg %p97
      %p206 = pneg %p121
      %p207 = pneg %p118
      %p208 = pneg %p147
      %p209 = pneg %p144
      %p210 = scmp.lt.s32.totalorder %s16, 1
      %s211 = scalar_select %p210, %s16, 1
      %s212 = smul.addr %s211, 2
      %s213 = smul.addr %s212, 8
      %s214 = scalar_lea.vmem %s5, %s213
      %p215 = scmp.lt.s32.totalorder %s16, 1
      %s216 = scalar_select %p215, %s16, 1
      %s217 = smul.addr %s216, 16
      %s218 = smul.addr %s217, 8
      %s219 = scalar_lea.vmem %s0, %s218
      %p220 = scmp.lt.s32.totalorder %s16, 1
      %s221 = scalar_select %p220, %s16, 1
      %s222 = smul.addr %s221, 2
      %s223 = smul.addr %s222, 8
      %s224 = scalar_lea.vmem %s5, %s223
      %v225 = vld [vmem:[%s219] sm:$0xff]
      %v226 = vld [vmem:[%s219 + $0x8] sm:$0xff]
      %v227 = vld [vmem:[%s219 + $0x10] sm:$0xff]
      %v228 = vld [vmem:[%s219 + $0x18] sm:$0xff]
      %v229 = vld [vmem:[%s219 + $0x20] sm:$0xff]
      %v230 = vld [vmem:[%s219 + $0x28] sm:$0xff]
      %v231 = vld [vmem:[%s219 + $0x30] sm:$0xff]
      %v232 = vld [vmem:[%s219 + $0x38] sm:$0xff]
      %v233 = vld [vmem:[%s219 + $0x40] sm:$0xff]
      %v234 = vld [vmem:[%s219 + $0x48] sm:$0xff]
      %v235 = vld [vmem:[%s219 + $0x50] sm:$0xff]
      %v236 = vld [vmem:[%s219 + $0x58] sm:$0xff]
      %v237 = vld [vmem:[%s219 + $0x60] sm:$0xff]
      %v238 = vld [vmem:[%s219 + $0x68] sm:$0xff]
      %v239 = vld [vmem:[%s219 + $0x70] sm:$0xff]
      %v240 = vld [vmem:[%s219 + $0x78] sm:$0xff]
      %vm241 = vcmask 64512
      %v242 = vsel %vm241, %v225, -inf
      %v243 = vsel %vm241, %v226, -inf
      %v244 = vmax.f32 %v242, %v243
      %v245 = vrot.slane %v244, 4
      %v246 = vmax.f32 %v244, %v245
      %v247 = vrot.slane %v246, 2
      %v248 = vmax.f32 %v246, %v247
      %v249 = vrot.slane %v248, 1
      %v250 = vmax.f32 %v248, %v249
      %v251 = vsel %vm241, %v227, -inf
      %v252 = vsel %vm241, %v228, -inf
      %v253 = vmax.f32 %v251, %v252
      %v254 = vrot.slane %v253, 4
      %v255 = vmax.f32 %v253, %v254
      %v256 = vrot.slane %v255, 2
      %v257 = vmax.f32 %v255, %v256
      %v258 = vrot.slane %v257, 1
      %v259 = vmax.f32 %v257, %v258
      %v260 = vsel %vm241, %v229, -inf
      %v261 = vsel %vm241, %v230, -inf
      %v262 = vmax.f32 %v260, %v261
      %v263 = vrot.slane %v262, 4
      %v264 = vmax.f32 %v262, %v263
      %v265 = vrot.slane %v264, 2
      %v266 = vmax.f32 %v264, %v265
      %v267 = vrot.slane %v266, 1
      %v268 = vmax.f32 %v266, %v267
      %v269 = vsel %vm241, %v231, -inf
      %v270 = vsel %vm241, %v232, -inf
      %v271 = vmax.f32 %v269, %v270
      %v272 = vrot.slane %v271, 4
      %v273 = vmax.f32 %v271, %v272
      %v274 = vrot.slane %v273, 2
      %v275 = vmax.f32 %v273, %v274
      %v276 = vrot.slane %v275, 1
      %v277 = vmax.f32 %v275, %v276
      %v278 = vsel %vm241, %v233, -inf
      %v279 = vsel %vm241, %v234, -inf
      %v280 = vmax.f32 %v278, %v279
      %v281 = vrot.slane %v280, 4
      %v282 = vmax.f32 %v280, %v281
      %v283 = vrot.slane %v282, 2
      %v284 = vmax.f32 %v282, %v283
      %v285 = vrot.slane %v284, 1
      %v286 = vmax.f32 %v284, %v285
      %v287 = vsel %vm241, %v235, -inf
      %v288 = vsel %vm241, %v236, -inf
      %v289 = vmax.f32 %v287, %v288
      %v290 = vrot.slane %v289, 4
      %v291 = vmax.f32 %v289, %v290
      %v292 = vrot.slane %v291, 2
      %v293 = vmax.f32 %v291, %v292
      %v294 = vrot.slane %v293, 1
      %v295 = vmax.f32 %v293, %v294
      %v296 = vsel %vm241, %v237, -inf
      %v297 = vsel %vm241, %v238, -inf
      %v298 = vmax.f32 %v296, %v297
      %v299 = vrot.slane %v298, 4
      %v300 = vmax.f32 %v298, %v299
      %v301 = vrot.slane %v300, 2
      %v302 = vmax.f32 %v300, %v301
      %v303 = vrot.slane %v302, 1
      %v304 = vmax.f32 %v302, %v303
      %v305 = vsel %vm241, %v239, -inf
      %v306 = vsel %vm241, %v240, -inf
      %v307 = vmax.f32 %v305, %v306
      %v308 = vrot.slane %v307, 4
      %v309 = vmax.f32 %v307, %v308
      %v310 = vrot.slane %v309, 2
      %v311 = vmax.f32 %v309, %v310
      %v312 = vrot.slane %v311, 1
      %v313 = vmax.f32 %v311, %v312
      %v314 = vlaneseq
      %v315 = vand.u32 %v314, 127
      %vm316 = vcmp.eq.s32.totalorder %v315, 0
      %vm325 = vcmask 1041409
      %v326 = vsel %vm325, %v259, %v250
      %vm327 = vcmask 1042434
      %v328 = vsel %vm327, %v268, %v326
      %vm329 = vcmask 1043459
      %v330 = vsel %vm329, %v277, %v328
      %vm331 = vcmask 1044484
      %v332 = vsel %vm331, %v286, %v330
      %vm333 = vcmask 1045509
      %v334 = vsel %vm333, %v295, %v332
      %vm335 = vcmask 1046534
      %v336 = vsel %vm335, %v304, %v334
      %vm337 = vcmask 1047559
      %v338 = vsel %vm337, %v313, %v336
      %vm340 = vcmask 1047616
      %341 = vrot.lane.b32.xlu0 %v338, 8
      %v342 = vpop.permute.xlu0 %341
      %v343 = vsel %vm340, %v342, %v338
      %344 = vrot.lane.b32.xlu0 %v343, 8
      %v345 = vpop.permute.xlu0 %344
      %v346 = vsel %vm340, %v345, %v338
      %348 = vrot.lane.b32.xlu0 %v346, 121
      %v349 = vpop.permute.xlu0 %348
      %v351 = vsel %vm316, 0.0, %v349
      %vm352 = vcmp.eq.s32.totalorder %v315, 7
      %353 = vrot.lane.b32.xlu0 %v346, 127
      %v354 = vpop.permute.xlu0 %353
      %v356 = vsel %vm352, 0.0, %v354
      %v357 = vld [vmem:[%s1] sm:$0xff]
      %v358 = vld [vmem:[%s3] sm:$0xff]
      %360 = vset.pattern.permute.xlu0 0
      %361 = vperm.xlu0 %360, %v358
      %v362 = vpop.permute.xlu0 %361
      %vm364 = vcmask 195584
      %v366 = vsel %vm364, %v357, 0
      %368 = vmatpush.msra.mxu0 0.0
      %369 = vmatpush.msra.mxu0 0.0
      %370 = vmatpush.msra.mxu0 0.0
      %371 = vmatpush.msra.mxu0 0.0
      %372 = vmatpush.msra.mxu0 0.0
      %373 = vmatpush.msra.mxu0 0.0
      %374 = vmatpush.msra.mxu0 0.0
      %375 = vmatpush.msra.mxu0 0.0
      %376 = vmatpush.msra.mxu0 0.0
      %377 = vmatpush.msra.mxu0 0.0
      %378 = vmatpush.msra.mxu0 0.0
      %379 = vmatpush.msra.mxu0 0.0
      %380 = vmatpush.msra.mxu0 0.0
      %381 = vmatpush.msra.mxu0 %v356
      %382 = vmatpush.msra.mxu0 %v338
      %383 = vmatpush.msra.mxu0 %v351
      %384 = vmatmul.f32.gmra.mxu0 %v366
      %v385 = vpop.f32.mrf.mxu0
      %v386 = vadd.f32 %v362, %v385
      %387 = vdwg.mxu0
      %v388 = vmax.f32 %v386, 0.0
      %v389 = vld [vmem:[%s2] sm:$0xff]
      %v390 = vld [vmem:[%s2 + $0x8] sm:$0xff]
      %v391 = vld [vmem:[%s4] sm:$0xff]
      %v392 = vld [vmem:[%s4 + $0x8] sm:$0xff]
      %394 = vset.pattern.permute.xlu0 0
      %395 = vperm.xlu0 %394, %v391
      %v396 = vpop.permute.xlu0 %395
      %399 = vset.pattern.permute.xlu0 0
      %400 = vperm.xlu0 %399, %v392
      %v401 = vpop.permute.xlu0 %400
      %v404 = vsel %vm241, %v389, 0
      %v407 = vsel %vm241, %v390, 0
      %409 = vmatpush.msra.mxu0 0.0
      %410 = vmatpush.msra.mxu0 0.0
      %411 = vmatpush.msra.mxu0 0.0
      %412 = vmatpush.msra.mxu0 0.0
      %413 = vmatpush.msra.mxu0 0.0
      %414 = vmatpush.msra.mxu0 0.0
      %415 = vmatpush.msra.mxu0 0.0
      %416 = vmatpush.msra.mxu0 0.0
      %417 = vmatpush.msra.mxu0 0.0
      %418 = vmatpush.msra.mxu0 0.0
      %419 = vmatpush.msra.mxu0 0.0
      %420 = vmatpush.msra.mxu0 0.0
      %421 = vmatpush.msra.mxu0 0.0
      %422 = vmatpush.msra.mxu0 0.0
      %423 = vmatpush.msra.mxu0 0.0
      %424 = vmatpush.msra.mxu0 %v388
      %425 = vmatmul.f32.gmra.mxu0 %v404
      %v426 = vpop.f32.mrf.mxu0
      %v427 = vadd.f32 %v396, %v426
      %428 = vmatmul.f32.gmra.mxu0 %v407
      %v429 = vpop.f32.mrf.mxu0
      %v430 = vadd.f32 %v401, %v429
      %431 = vdwg.mxu0
      %v432 = vmax.f32 %v427, 0.0
      %v433 = vmax.f32 %v430, 0.0
      %434 = vst.msk [vmem:[%s224] sm:$0xff] %vm241, %v432
      %435 = vst.msk [vmem:[%s224 + $0x8] sm:$0xff] %vm241, %v433
      %p436 = scmp.lt.s32.totalorder %s16, 1
      %s437 = scalar_select %p436, %s16, 1
      %s438 = smul.addr %s437, 2
      %s439 = smul.addr %s438, 8
      %s440 = scalar_lea.vmem %s5, %s439
      // Predicated region
      $region41: #{tpu_custom_call.1} parent=39 // pred_check
        %p441 = pneg %p144
      $region42: #{tpu_custom_call.1} parent=39 // pred_check_branch
        %443 = sbr.rel (%p441) target = $region44
      $region43: #{tpu_custom_call.1} parent=39 // pred_region
        _
      $region44: #{tpu_custom_call.1} parent=39 // pred_fallthru
        _
    $region40: #{tpu_custom_call.1} parent=5 // pred_fallthru
      _
    %p444 = scmp.le.s32.totalorder 2, %s11
    // Predicated region
    $region45: #{tpu_custom_call.1} parent=5 // pred_check
      %p445 = pneg %p444
    $region46: #{tpu_custom_call.1} parent=5 // pred_check_branch
      %447 = sbr.rel (%p445) target = $region48
    $region47: #{tpu_custom_call.1} parent=5 // pred_region
      %s448 = ssub.s32 %s11, 2
      // Predicated region
      $region49: #{tpu_custom_call.1} parent=47 // pred_check
        %p449 = pneg %p150
      $region50: #{tpu_custom_call.1} parent=47 // pred_check_branch
        %451 = sbr.rel (%p449) target = $region52
      $region51: #{tpu_custom_call.1} parent=47 // pred_region
        %p452 = scmp.lt.s32.totalorder %s17, 1
        %s453 = scalar_select %p452, %s17, 1
        %s454 = smul.addr %s453, 2
        %s455 = smul.addr %s454, 8
        %s456 = scalar_lea.vmem %s5, %s455
      $region52: #{tpu_custom_call.1} parent=47 // pred_fallthru
        _
    $region48: #{tpu_custom_call.1} parent=5 // pred_fallthru
      _
  $region6: #{tpu_custom_call.1} parent=0 // loop_footer
    %s15 = sadd.s32 1, %s11
  $region7: #{tpu_custom_call.1} parent=0 // loop_footer_branch
    %10 = sbr.rel target = $region3
  $region8: #{tpu_custom_call.1} parent=0 // loop_exit
    _

</llo_original>
